<compile_context>
chip_gen: v5e
topology: v5e:2x2
jax: 0.10.0
libtpu: 0.0.40
codegen_flags: <defaults>
</compile_context>

<pallas_src>
import jax
import jax.numpy as jnp
from jax.experimental import pallas as pl
from jax.experimental.pallas import tpu as pltpu


def _round_up(x, m):
    return (x + m - 1) // m * m


def aux_kernel(x_ref, w1p_ref, b1_ref, w2t_ref, b2_ref, wft_ref, bf_ref, o_ref):
    # AvgPool(5,3,pad=2)->1x1  +  conv_relu(C,128,1)  folded into one matmul.
    # w1p already carries the replicated 1/25 pooling weights.
    h1 = jnp.dot(x_ref[...], w1p_ref[...],
                 preferred_element_type=jnp.float32) + b1_ref[...]
    h1 = jnp.maximum(h1, 0.0)                         # f32 epilogue

    # conv_relu(128, 768, 5, pad=2) on 1x1 spatial: center-tap matmul + ReLU.
    h2 = jnp.dot(h1.astype(jnp.bfloat16), w2t_ref[...],
                 preferred_element_type=jnp.float32) + b2_ref[...]
    h2 = jnp.maximum(h2, 0.0)

    # TODO(synk): Dropout(p=0.4) is identity in eval mode; training-mode
    # masking / (1/(1-p)) scaling is not implemented here.

    # classifier Linear(768, num_class), output padded to 128 lanes.
    o_ref[...] = jnp.dot(h2.astype(jnp.bfloat16), wft_ref[...],
                         preferred_element_type=jnp.float32) + bf_ref[...]


def module_aux_forward(x, params, *, batch_tile=16):
    """x: (N, C, H, W) NCHW float32.  Returns (N, num_class) float32."""
    N, C, H, W = x.shape
    w1, b1, w2, b2, wf, bf = params
    num_class = wf.shape[0]

    # Shape precondition: AvgPool2d(5,3,pad=2) must yield 1x1 spatial because
    # the classifier Linear(768, .) expects exactly 768 = 768*1*1 features.
    assert (H + 4 - 5) // 3 + 1 == 1 and (W + 4 - 5) // 3 + 1 == 1, (
        "ModuleAux kernel requires the pooled spatial size to be 1x1 "
        "(H, W <= 3 for kernel=5, stride=3, padding=2).")

    HW = H * W
    K1 = C * HW
    K1p = _round_up(K1, 128)          # lane-dense first contraction dim
    NCp = _round_up(num_class, 128)   # lane-dense output width
    Np = _round_up(N, batch_tile)     # sublane-aligned batch (bf16 -> 16)

    # ---- wrapper-side layout / dtype plumbing (plain JAX) ----
    # Fold AvgPool (count_include_pad -> divisor 25) into the first matmul.
    x2d = x.reshape(N, K1)
    x2d = jnp.pad(x2d, ((0, Np - N), (0, K1p - K1))).astype(jnp.bfloat16)

    w1t = w1.reshape(128, C).T                         # (C, 128)
    w1p = jnp.repeat(w1t, HW, axis=0) * (1.0 / 25.0)   # (C*HW, 128)
    w1p = jnp.pad(w1p, ((0, K1p - K1), (0, 0))).astype(jnp.bfloat16)

    w2t = w2[:, :, 2, 2].T.astype(jnp.bfloat16)        # (128, 768) center tap
    wft = jnp.pad(wf.T, ((0, 0), (0, NCp - num_class))).astype(jnp.bfloat16)

    b1r = b1.reshape(1, 128).astype(jnp.float32)
    b2r = b2.reshape(1, 768).astype(jnp.float32)
    bfr = jnp.pad(bf.reshape(1, num_class),
                  ((0, 0), (0, NCp - num_class))).astype(jnp.float32)

    grid = (Np // batch_tile,)
    flops = 2 * Np * (K1p * 128 + 128 * 768 + 768 * NCp)
    bytes_accessed = (x2d.size * 2 + w1p.size * 2 + w2t.size * 2
                      + wft.size * 2 + b1r.size * 4 + b2r.size * 4
                      + bfr.size * 4 + Np * NCp * 4)

    out = pl.pallas_call(
        aux_kernel,
        out_shape=jax.ShapeDtypeStruct((Np, NCp), jnp.float32),
        grid=grid,
        in_specs=[
            pl.BlockSpec((batch_tile, K1p), lambda i: (i, 0)),  # x tile
            pl.BlockSpec((K1p, 128), lambda i: (0, 0)),         # w1 (resident)
            pl.BlockSpec((1, 128), lambda i: (0, 0)),           # b1
            pl.BlockSpec((128, 768), lambda i: (0, 0)),         # w2 (resident)
            pl.BlockSpec((1, 768), lambda i: (0, 0)),           # b2
            pl.BlockSpec((768, NCp), lambda i: (0, 0)),          # wf (resident)
            pl.BlockSpec((1, NCp), lambda i: (0, 0)),             # bf
        ],
        out_specs=pl.BlockSpec((batch_tile, NCp), lambda i: (i, 0)),
        compiler_params=pltpu.CompilerParams(
            dimension_semantics=("parallel",)),
        cost_estimate=pl.CostEstimate(
            flops=flops, transcendentals=0, bytes_accessed=bytes_accessed),
    )(x2d, w1p, b1r, w2t, b2r, wft, bfr)

    return out[:N, :num_class]


def reference(x, params):
    """Pure-JAX f32 reference mirroring the PyTorch module (eval mode)."""
    w1, b1, w2, b2, wf, bf = params
    dn = ("NCHW", "OIHW", "NCHW")
    s = jax.lax.reduce_window(x, 0.0, jax.lax.add, (1, 1, 5, 5), (1, 1, 3, 3),
                              [(0, 0), (0, 0), (2, 2), (2, 2)])
    pooled = s / 25.0                                   # count_include_pad=True
    y = jax.lax.conv_general_dilated(pooled, w1, (1, 1), "VALID",
                                     dimension_numbers=dn)
    y = jnp.maximum(y + b1[None, :, None, None], 0.0)
    y = jax.lax.conv_general_dilated(y, w2, (1, 1), [(2, 2), (2, 2)],
                                     dimension_numbers=dn)
    y = jnp.maximum(y + b2[None, :, None, None], 0.0)
    y = y.reshape(y.shape[0], -1)
    return y @ wf.T + bf


if __name__ == "__main__":
    # Spatial 3x3 so AvgPool2d(5,3,pad=2) -> 1x1, as required by Linear(768,.)
    N, in_channel, H, W, num_class = 2, 8, 3, 3, 10

    key = jax.random.PRNGKey(0)
    ks = jax.random.split(key, 7)
    x = jax.random.normal(ks[0], (N, in_channel, H, W), jnp.float32)
    w1 = jax.random.normal(ks[1], (128, in_channel, 1, 1), jnp.float32) * 0.1
    b1 = jax.random.normal(ks[2], (128,), jnp.float32) * 0.1
    w2 = jax.random.normal(ks[3], (768, 128, 5, 5), jnp.float32) * 0.02
    b2 = jax.random.normal(ks[4], (768,), jnp.float32) * 0.1
    wf = jax.random.normal(ks[5], (num_class, 768), jnp.float32) * 0.02
    bf = jax.random.normal(ks[6], (num_class,), jnp.float32) * 0.1
    params = (w1, b1, w2, b2, wf, bf)

    out = jax.block_until_ready(module_aux_forward(x, params))
    ref = jax.block_until_ready(reference(x, params))
    assert out.shape == (N, num_class)
    # bf16 MXU operands with f32 accumulation: loose-ish tolerance vs f32 ref.
    assert jnp.allclose(out, ref, atol=3e-2, rtol=3e-2), (
        jnp.max(jnp.abs(out - ref)))
    print("KERNEL_OK")
</pallas_src>

<mosaic_0001>
module attributes {stable_mosaic.version = 11 : i64} {
  func.func @aux_kernel(%arg0: i32, %arg1: memref<16x128xbf16, #tpu.memory_space<vmem>>, %arg2: memref<128x128xbf16, #tpu.memory_space<vmem>>, %arg3: memref<1x128xf32, #tpu.memory_space<vmem>>, %arg4: memref<128x768xbf16, #tpu.memory_space<vmem>>, %arg5: memref<1x768xf32, #tpu.memory_space<vmem>>, %arg6: memref<768x128xbf16, #tpu.memory_space<vmem>>, %arg7: memref<1x128xf32, #tpu.memory_space<vmem>>, %arg8: memref<16x128xf32, #tpu.memory_space<vmem>>) attributes {dimension_semantics = [#tpu.dimension_semantics<parallel>], iteration_bounds = array<i64: 1>, scalar_prefetch = 0 : i64, scratch_operands = 0 : i64, tpu.core_type = #tpu.core_type<tc>, window_params = [{transform_indices = @transform_0, window_bounds = array<i64: 16, 128>}, {pipeline_mode = #tpu.pipeline_mode<synchronous>, transform_indices = @transform_1, window_bounds = array<i64: 128, 128>}, {pipeline_mode = #tpu.pipeline_mode<synchronous>, transform_indices = @transform_2, window_bounds = array<i64: 1, 128>}, {pipeline_mode = #tpu.pipeline_mode<synchronous>, transform_indices = @transform_3, window_bounds = array<i64: 128, 768>}, {pipeline_mode = #tpu.pipeline_mode<synchronous>, transform_indices = @transform_4, window_bounds = array<i64: 1, 768>}, {pipeline_mode = #tpu.pipeline_mode<synchronous>, transform_indices = @transform_5, window_bounds = array<i64: 768, 128>}, {pipeline_mode = #tpu.pipeline_mode<synchronous>, transform_indices = @transform_6, window_bounds = array<i64: 1, 128>}, {transform_indices = @transform_7, window_bounds = array<i64: 16, 128>}]} {
    %c0 = arith.constant 0 : index
    %c0_0 = arith.constant 0 : index
    %0 = vector.load %arg1[%c0, %c0_0] : memref<16x128xbf16, #tpu.memory_space<vmem>>, vector<16x128xbf16>
    %c0_1 = arith.constant 0 : index
    %c0_2 = arith.constant 0 : index
    %1 = vector.load %arg2[%c0_1, %c0_2] : memref<128x128xbf16, #tpu.memory_space<vmem>>, vector<128x128xbf16>
    %cst = arith.constant dense<0.000000e+00> : vector<16x128xf32>
    %2 = tpu.matmul %0, %1, %cst {dimension_numbers = #tpu.dot_dimension_numbers<[1], [0], [0], [1], [0, 0, 1, 1], [], []>} : vector<16x128xbf16>, vector<128x128xbf16>, vector<16x128xf32> -> vector<16x128xf32>
    %c0_3 = arith.constant 0 : index
    %c0_4 = arith.constant 0 : index
    %3 = vector.load %arg3[%c0_3, %c0_4] : memref<1x128xf32, #tpu.memory_space<vmem>>, vector<1x128xf32>
    %4 = vector.broadcast %3 : vector<1x128xf32> to vector<16x128xf32>
    %5 = arith.addf %2, %4 : vector<16x128xf32>
    %cst_5 = arith.constant 0.000000e+00 : f32
    %6 = vector.broadcast %cst_5 : f32 to vector<16x128xf32>
    %7 = arith.maximumf %5, %6 : vector<16x128xf32>
    %8 = arith.truncf %7 : vector<16x128xf32> to vector<16x128xbf16>
    %c0_6 = arith.constant 0 : index
    %c0_7 = arith.constant 0 : index
    %9 = vector.load %arg4[%c0_6, %c0_7] : memref<128x768xbf16, #tpu.memory_space<vmem>>, vector<128x768xbf16>
    %cst_8 = arith.constant dense<0.000000e+00> : vector<16x768xf32>
    %10 = tpu.matmul %8, %9, %cst_8 {dimension_numbers = #tpu.dot_dimension_numbers<[1], [0], [0], [1], [0, 0, 1, 1], [], []>} : vector<16x128xbf16>, vector<128x768xbf16>, vector<16x768xf32> -> vector<16x768xf32>
    %c0_9 = arith.constant 0 : index
    %c0_10 = arith.constant 0 : index
    %11 = vector.load %arg5[%c0_9, %c0_10] : memref<1x768xf32, #tpu.memory_space<vmem>>, vector<1x768xf32>
    %12 = vector.broadcast %11 : vector<1x768xf32> to vector<16x768xf32>
    %13 = arith.addf %10, %12 : vector<16x768xf32>
    %cst_11 = arith.constant 0.000000e+00 : f32
    %14 = vector.broadcast %cst_11 : f32 to vector<16x768xf32>
    %15 = arith.maximumf %13, %14 : vector<16x768xf32>
    %16 = arith.truncf %15 : vector<16x768xf32> to vector<16x768xbf16>
    %c0_12 = arith.constant 0 : index
    %c0_13 = arith.constant 0 : index
    %17 = vector.load %arg6[%c0_12, %c0_13] : memref<768x128xbf16, #tpu.memory_space<vmem>>, vector<768x128xbf16>
    %cst_14 = arith.constant dense<0.000000e+00> : vector<16x128xf32>
    %18 = tpu.matmul %16, %17, %cst_14 {dimension_numbers = #tpu.dot_dimension_numbers<[1], [0], [0], [1], [0, 0, 1, 1], [], []>} : vector<16x768xbf16>, vector<768x128xbf16>, vector<16x128xf32> -> vector<16x128xf32>
    %c0_15 = arith.constant 0 : index
    %c0_16 = arith.constant 0 : index
    %19 = vector.load %arg7[%c0_15, %c0_16] : memref<1x128xf32, #tpu.memory_space<vmem>>, vector<1x128xf32>
    %20 = vector.broadcast %19 : vector<1x128xf32> to vector<16x128xf32>
    %21 = arith.addf %18, %20 : vector<16x128xf32>
    %c0_17 = arith.constant 0 : index
    %c0_18 = arith.constant 0 : index
    %22 = vector.load %arg8[%c0_17, %c0_18] : memref<16x128xf32, #tpu.memory_space<vmem>>, vector<16x128xf32>
    tpu.vector_store %arg8[%c0_17, %c0_18], %21 {strides = array<i32>} : memref<16x128xf32, #tpu.memory_space<vmem>>, vector<16x128xf32>,
    return
  }
  func.func @transform_0(%arg0: i32) -> (i32, i32) {
    %c0_i32 = arith.constant 0 : i32
    %c0_i32_0 = arith.constant 0 : i32
    return %arg0, %c0_i32 : i32, i32
  }
  func.func @transform_1(%arg0: i32) -> (i32, i32) {
    %c0_i32 = arith.constant 0 : i32
    %c0_i32_0 = arith.constant 0 : i32
    %c0_i32_1 = arith.constant 0 : i32
    return %c0_i32, %c0_i32_0 : i32, i32
  }
  func.func @transform_2(%arg0: i32) -> (i32, i32) {
    %c0_i32 = arith.constant 0 : i32
    %c0_i32_0 = arith.constant 0 : i32
    %c0_i32_1 = arith.constant 0 : i32
    return %c0_i32, %c0_i32_0 : i32, i32
  }
  func.func @transform_3(%arg0: i32) -> (i32, i32) {
    %c0_i32 = arith.constant 0 : i32
    %c0_i32_0 = arith.constant 0 : i32
    %c0_i32_1 = arith.constant 0 : i32
    return %c0_i32, %c0_i32_0 : i32, i32
  }
  func.func @transform_4(%arg0: i32) -> (i32, i32) {
    %c0_i32 = arith.constant 0 : i32
    %c0_i32_0 = arith.constant 0 : i32
    %c0_i32_1 = arith.constant 0 : i32
    return %c0_i32, %c0_i32_0 : i32, i32
  }
  func.func @transform_5(%arg0: i32) -> (i32, i32) {
    %c0_i32 = arith.constant 0 : i32
    %c0_i32_0 = arith.constant 0 : i32
    %c0_i32_1 = arith.constant 0 : i32
    return %c0_i32, %c0_i32_0 : i32, i32
  }
  func.func @transform_6(%arg0: i32) -> (i32, i32) {
    %c0_i32 = arith.constant 0 : i32
    %c0_i32_0 = arith.constant 0 : i32
    %c0_i32_1 = arith.constant 0 : i32
    return %c0_i32, %c0_i32_0 : i32, i32
  }
  func.func @transform_7(%arg0: i32) -> (i32, i32) {
    %c0_i32 = arith.constant 0 : i32
    %c0_i32_0 = arith.constant 0 : i32
    return %arg0, %c0_i32 : i32, i32
  }
}

</mosaic_0001>

<llo_original>
// kernel: tpu_custom_call.1
$region0: #{tpu_custom_call.1}
  #allocation0 [shape = 'u32[]', space=smem, size = 0x4, offset = 0x4, fixed_abs, tag = 'smem constant byte address 0x4 - core index']
  #allocation1 [shape = 'u32[72,128]{1,0:T(1,128)}', space=vmem, size = 0x9000, scoped, tag = 'internal scratch']
  %s0 = inlined_call_operand.hbm [shape: bf16[16,128], index: 0, kind: input, shape index: {}]
  %s1 = inlined_call_operand.hbm [shape: bf16[128,128], index: 1, kind: input, shape index: {}]
  %s2 = inlined_call_operand.vmem [shape: f32[1,128], index: 2, kind: input, shape index: {}]
  %s3 = inlined_call_operand.hbm [shape: bf16[128,768], index: 3, kind: input, shape index: {}]
  %s4 = inlined_call_operand.hbm [shape: f32[1,768], index: 4, kind: input, shape index: {}]
  %s5 = inlined_call_operand.hbm [shape: bf16[768,128], index: 5, kind: input, shape index: {}]
  %s6 = inlined_call_operand.vmem [shape: f32[1,128], index: 6, kind: input, shape index: {}]
  %s7 = inlined_call_operand.hbm [shape: f32[16,128], index: 7, kind: output, shape index: {}]
  %s8 = sld [smem:[#allocation0]]
  $region58: #{tpu_custom_call.1} parent=0
    _
  %s10 = ssub.s32 1, %s8
  %s11 = scalar_select 0, %s10, %s8
  $region1: #{tpu_custom_call.1} parent=0
    #allocation2 [shape = 'u8[4096]{0}', space=vmem, size = 0x1000, scoped, tag = 'input window, operand 0, single buffered']
    #allocation3 [shape = 's32[1]{0}', space=sflag, size = 0x4, scoped, tag = 'scoped memory for tpu_custom_call.1']
    #allocation4 [shape = 's32[1]{0}', space=sflag, size = 0x4, scoped, tag = 'scoped memory for tpu_custom_call.1']
    #allocation5 [shape = 'u8[32768]{0}', space=vmem, size = 0x8000, scoped, tag = 'input window, operand 1, single buffered']
    #allocation6 [shape = 's32[1]{0}', space=sflag, size = 0x4, scoped, tag = 'scoped memory for tpu_custom_call.1']
    #allocation7 [shape = 'u8[196608]{0}', space=vmem, size = 0x30000, scoped, tag = 'input window, operand 3, single buffered']
    #allocation8 [shape = 'u8[3072]{0}', space=vmem, size = 0xc00, scoped, tag = 'input window, operand 4, single buffered']
    #allocation9 [shape = 's32[1]{0}', space=sflag, size = 0x4, scoped, tag = 'scoped memory for tpu_custom_call.1']
    #allocation10 [shape = 'u8[196608]{0}', space=vmem, size = 0x30000, scoped, tag = 'input window, operand 5, single buffered']
    #allocation11 [shape = 'u8[8192]{0}', space=vmem, size = 0x2000, scoped, tag = 'output window, operand 0, single buffered']
    %12 = vsyncpa [#allocation3], 0
    %13 = vsyncpa [#allocation6], 0
    %14 = vsyncpa [#allocation9], 0
    %15 = vsyncpa [#allocation4], 0
    // Predicated region
    $region2: #{tpu_custom_call.1} parent=1 // pred_check
      _
    $region3: #{tpu_custom_call.1} parent=1 // pred_check_branch
      %17 = sbr.rel (0) target = $region5
    $region4: #{tpu_custom_call.1} parent=1 // pred_region
      %19 = vsyncadd [#allocation3], 0
      %s20 = sshll.u32 %s0, 4
      %s21 = int_to_ptr.hbm [resolvable:$true] %s20
      %s22 = sshll.u32 [#allocation2], 4
      %s23 = int_to_ptr.vmem [resolvable:$true] %s22
      %28 = dma.hbm_to_vmem [thread:$0]  %s21, 128, %s23, [#allocation3], 64, 64, 4
    $region5: #{tpu_custom_call.1} parent=1 // pred_fallthru
      _
    // Predicated region
    $region6: #{tpu_custom_call.1} parent=1 // pred_check
      _
    $region7: #{tpu_custom_call.1} parent=1 // pred_check_branch
      %30 = sbr.rel (0) target = $region9
    $region8: #{tpu_custom_call.1} parent=1 // pred_region
      %32 = vsyncadd [#allocation6], 0
      %s33 = sshll.u32 %s1, 4
      %s34 = int_to_ptr.hbm [resolvable:$true] %s33
      %s35 = sshll.u32 [#allocation5], 4
      %s36 = int_to_ptr.vmem [resolvable:$true] %s35
      %41 = dma.hbm_to_vmem [thread:$0]  %s34, 1024, %s36, [#allocation6], 64, 64, 4
    $region9: #{tpu_custom_call.1} parent=1 // pred_fallthru
      _
    // Predicated region
    $region10: #{tpu_custom_call.1} parent=1 // pred_check
      _
    $region11: #{tpu_custom_call.1} parent=1 // pred_check_branch
      %43 = sbr.rel (0) target = $region13
    $region12: #{tpu_custom_call.1} parent=1 // pred_region
      _
    $region13: #{tpu_custom_call.1} parent=1 // pred_fallthru
      _
    // Predicated region
    $region14: #{tpu_custom_call.1} parent=1 // pred_check
      _
    $region15: #{tpu_custom_call.1} parent=1 // pred_check_branch
      %45 = sbr.rel (0) target = $region17
    $region16: #{tpu_custom_call.1} parent=1 // pred_region
      %47 = vsyncadd [#allocation6], 0
      %s48 = sshll.u32 %s3, 4
      %s49 = int_to_ptr.hbm [resolvable:$true] %s48
      %s50 = sshll.u32 [#allocation7], 4
      %s51 = int_to_ptr.vmem [resolvable:$true] %s50
      %56 = dma.hbm_to_vmem [thread:$0]  %s49, 6144, %s51, [#allocation6], 384, 384, 24
    $region17: #{tpu_custom_call.1} parent=1 // pred_fallthru
      _
    // Predicated region
    $region18: #{tpu_custom_call.1} parent=1 // pred_check
      _
    $region19: #{tpu_custom_call.1} parent=1 // pred_check_branch
      %58 = sbr.rel (0) target = $region21
    $region20: #{tpu_custom_call.1} parent=1 // pred_region
      %60 = vsyncadd [#allocation9], 0
      %s62 = sshll.u32 %s4, 4
      %s63 = int_to_ptr.hbm [resolvable:$true] %s62
      %s64 = sshll.u32 [#allocation8], 4
      %s65 = int_to_ptr.vmem [resolvable:$true] %s64
      %67 = dma.hbm_to_vmem [thread:$0]  %s63, 96, %s65, [#allocation9]
    $region21: #{tpu_custom_call.1} parent=1 // pred_fallthru
      _
    // Predicated region
    $region22: #{tpu_custom_call.1} parent=1 // pred_check
      _
    $region23: #{tpu_custom_call.1} parent=1 // pred_check_branch
      %69 = sbr.rel (0) target = $region25
    $region24: #{tpu_custom_call.1} parent=1 // pred_region
      %71 = vsyncadd [#allocation9], 0
      %s72 = sshll.u32 %s5, 4
      %s73 = int_to_ptr.hbm [resolvable:$true] %s72
      %s74 = sshll.u32 [#allocation10], 4
      %s75 = int_to_ptr.vmem [resolvable:$true] %s74
      %80 = dma.hbm_to_vmem [thread:$0]  %s73, 6144, %s75, [#allocation9], 64, 64, 4
    $region25: #{tpu_custom_call.1} parent=1 // pred_fallthru
      _
    // Predicated region
    $region26: #{tpu_custom_call.1} parent=1 // pred_check
      _
    $region27: #{tpu_custom_call.1} parent=1 // pred_check_branch
      %82 = sbr.rel (0) target = $region29
    $region28: #{tpu_custom_call.1} parent=1 // pred_region
      _
    $region29: #{tpu_custom_call.1} parent=1 // pred_fallthru
      _
    // Predicated region
    $region30: #{tpu_custom_call.1} parent=1 // pred_check
      _
    $region31: #{tpu_custom_call.1} parent=1 // pred_check_branch
      %84 = sbr.rel (0) target = $region33
    $region32: #{tpu_custom_call.1} parent=1 // pred_region
      %86 = dma.done [#allocation3], 128
    $region33: #{tpu_custom_call.1} parent=1 // pred_fallthru
      _
    // Predicated region
    $region34: #{tpu_custom_call.1} parent=1 // pred_check
      _
    $region35: #{tpu_custom_call.1} parent=1 // pred_check_branch
      %88 = sbr.rel (0) target = $region37
    $region36: #{tpu_custom_call.1} parent=1 // pred_region
      %90 = dma.done [#allocation6], 1024
    $region37: #{tpu_custom_call.1} parent=1 // pred_fallthru
      _
    // Predicated region
    $region38: #{tpu_custom_call.1} parent=1 // pred_check
      _
    $region39: #{tpu_custom_call.1} parent=1 // pred_check_branch
      %92 = sbr.rel (0) target = $region41
    $region40: #{tpu_custom_call.1} parent=1 // pred_region
      %94 = dma.done [#allocation6], 6144
    $region41: #{tpu_custom_call.1} parent=1 // pred_fallthru
      _
    // Predicated region
    $region42: #{tpu_custom_call.1} parent=1 // pred_check
      _
    $region43: #{tpu_custom_call.1} parent=1 // pred_check_branch
      %96 = sbr.rel (0) target = $region45
    $region44: #{tpu_custom_call.1} parent=1 // pred_region
      %98 = dma.done [#allocation9], 96
    $region45: #{tpu_custom_call.1} parent=1 // pred_fallthru
      _
    // Predicated region
    $region46: #{tpu_custom_call.1} parent=1 // pred_check
      _
    $region47: #{tpu_custom_call.1} parent=1 // pred_check_branch
      %100 = sbr.rel (0) target = $region49
    $region48: #{tpu_custom_call.1} parent=1 // pred_region
      %102 = dma.done [#allocation9], 6144
    $region49: #{tpu_custom_call.1} parent=1 // pred_fallthru
      _
    %v103 = vld [vmem:[#allocation2] sm:$0xf]
    %v104 = vld [vmem:[#allocation2 + $0x4] sm:$0xf]
    %v105 = vld [vmem:[#allocation5] sm:$0xf]
    %v106 = vld [vmem:[#allocation5 + $0x4] sm:$0xf]
    %v107 = vld [vmem:[#allocation5 + $0x8] sm:$0xf]
    %v108 = vld [vmem:[#allocation5 + $0xc] sm:$0xf]
    %v109 = vld [vmem:[#allocation5 + $0x10] sm:$0xf]
    %v110 = vld [vmem:[#allocation5 + $0x14] sm:$0xf]
    %v111 = vld [vmem:[#allocation5 + $0x18] sm:$0xf]
    %v112 = vld [vmem:[#allocation5 + $0x1c] sm:$0xf]
    %v113 = vld [vmem:[#allocation5 + $0x20] sm:$0xf]
    %v114 = vld [vmem:[#allocation5 + $0x24] sm:$0xf]
    %v115 = vld [vmem:[#allocation5 + $0x28] sm:$0xf]
    %v116 = vld [vmem:[#allocation5 + $0x2c] sm:$0xf]
    %v117 = vld [vmem:[#allocation5 + $0x30] sm:$0xf]
    %v118 = vld [vmem:[#allocation5 + $0x34] sm:$0xf]
    %v119 = vld [vmem:[#allocation5 + $0x38] sm:$0xf]
    %v120 = vld [vmem:[#allocation5 + $0x3c] sm:$0xf]
    %v121 = vld [vmem:[%s2] sm:$0x1]
    %v123 = vperm.slane %v121, 0
    %v127 = vunpack.c.l.b16 %v103
    %v128 = vunpack.c.l.b16 %v104
    %v129 = vpack.c.b16 %v128, %v127
    %v147 = vunpack.c.l.b16 %v105
    %v148 = vunpack.c.l.b16 %v106
    %v149 = vunpack.c.l.b16 %v107
    %v150 = vunpack.c.l.b16 %v108
    %v151 = vunpack.c.l.b16 %v109
    %v152 = vunpack.c.l.b16 %v110
    %v153 = vunpack.c.l.b16 %v111
    %v154 = vunpack.c.l.b16 %v112
    %v155 = vunpack.c.l.b16 %v113
    %v156 = vunpack.c.l.b16 %v114
    %v157 = vunpack.c.l.b16 %v115
    %v158 = vunpack.c.l.b16 %v116
    %v159 = vunpack.c.l.b16 %v117
    %v160 = vunpack.c.l.b16 %v118
    %v161 = vunpack.c.l.b16 %v119
    %v162 = vunpack.c.l.b16 %v120
    %v163 = vpack.c.b16 %v148, %v147
    %v164 = vpack.c.b16 %v150, %v149
    %v165 = vpack.c.b16 %v152, %v151
    %v166 = vpack.c.b16 %v154, %v153
    %v167 = vpack.c.b16 %v156, %v155
    %v168 = vpack.c.b16 %v158, %v157
    %v169 = vpack.c.b16 %v160, %v159
    %v170 = vpack.c.b16 %v162, %v161
    %179 = vmatpush.bf16.msra.mxu0 %v170
    %180 = vmatpush.bf16.msra.mxu0 %v169
    %181 = vmatpush.bf16.msra.mxu0 %v168
    %182 = vmatpush.bf16.msra.mxu0 %v167
    %183 = vmatpush.bf16.msra.mxu0 %v166
    %184 = vmatpush.bf16.msra.mxu0 %v165
    %185 = vmatpush.bf16.msra.mxu0 %v164
    %186 = vmatpush.bf16.msra.mxu0 %v163
    %187 = vmatmul.bf16.gmra.mxu0 %v129
    %v188 = vpop.f32.mrf.mxu0
    %v189 = vadd.f32 %v123, %v188
    %v190 = vpop.f32.mrf.mxu0
    %v191 = vadd.f32 %v123, %v190
    %192 = vdwg.mxu0
    %v193 = vmax.f32 %v189, 0.0
    %v194 = vmax.f32 %v191, 0.0
    %v195 = vpack.c.bf16 %v194, %v193
    %v196 = vld [vmem:[#allocation7] sm:$0xff]
    %v197 = vld [vmem:[#allocation7 + $0x8] sm:$0xff]
    %v198 = vld [vmem:[#allocation7 + $0x10] sm:$0xff]
    %v199 = vld [vmem:[#allocation7 + $0x18] sm:$0xff]
    %v200 = vld [vmem:[#allocation7 + $0x20] sm:$0xff]
    %v201 = vld [vmem:[#allocation7 + $0x28] sm:$0xff]
    %v202 = vld [vmem:[#allocation7 + $0x30] sm:$0xff]
    %v203 = vld [vmem:[#allocation7 + $0x38] sm:$0xff]
    %v204 = vld [vmem:[#allocation7 + $0x40] sm:$0xff]
    %v205 = vld [vmem:[#allocation7 + $0x48] sm:$0xff]
    %v206 = vld [vmem:[#allocation7 + $0x50] sm:$0xff]
    %v207 = vld [vmem:[#allocation7 + $0x58] sm:$0xff]
    %v208 = vld [vmem:[#allocation7 + $0x60] sm:$0xff]
    %v209 = vld [vmem:[#allocation7 + $0x68] sm:$0xff]
    %v210 = vld [vmem:[#allocation7 + $0x70] sm:$0xff]
    %v211 = vld [vmem:[#allocation7 + $0x78] sm:$0xff]
    %v212 = vld [vmem:[#allocation7 + $0x80] sm:$0xff]
    %v213 = vld [vmem:[#allocation7 + $0x88] sm:$0xff]
    %v214 = vld [vmem:[#allocation7 + $0x90] sm:$0xff]
    %v215 = vld [vmem:[#allocation7 + $0x98] sm:$0xff]
    %v216 = vld [vmem:[#allocation7 + $0xa0] sm:$0xff]
    %v217 = vld [vmem:[#allocation7 + $0xa8] sm:$0xff]
    %v218 = vld [vmem:[#allocation7 + $0xb0] sm:$0xff]
    %v219 = vld [vmem:[#allocation7 + $0xb8] sm:$0xff]
    %v220 = vld [vmem:[#allocation7 + $0xc0] sm:$0xff]
    %v221 = vld [vmem:[#allocation7 + $0xc8] sm:$0xff]
    %v222 = vld [vmem:[#allocation7 + $0xd0] sm:$0xff]
    %v223 = vld [vmem:[#allocation7 + $0xd8] sm:$0xff]
    %v224 = vld [vmem:[#allocation7 + $0xe0] sm:$0xff]
    %v225 = vld [vmem:[#allocation7 + $0xe8] sm:$0xff]
    %v226 = vld [vmem:[#allocation7 + $0xf0] sm:$0xff]
    %v227 = vld [vmem:[#allocation7 + $0xf8] sm:$0xff]
    %v228 = vld [vmem:[#allocation7 + $0x100] sm:$0xff]
    %v229 = vld [vmem:[#allocation7 + $0x108] sm:$0xff]
    %v230 = vld [vmem:[#allocation7 + $0x110] sm:$0xff]
    %v231 = vld [vmem:[#allocation7 + $0x118] sm:$0xff]
    %v232 = vld [vmem:[#allocation7 + $0x120] sm:$0xff]
    %v233 = vld [vmem:[#allocation7 + $0x128] sm:$0xff]
    %v234 = vld [vmem:[#allocation7 + $0x130] sm:$0xff]
    %v235 = vld [vmem:[#allocation7 + $0x138] sm:$0xff]
    %v236 = vld [vmem:[#allocation7 + $0x140] sm:$0xff]
    %v237 = vld [vmem:[#allocation7 + $0x148] sm:$0xff]
    %v238 = vld [vmem:[#allocation7 + $0x150] sm:$0xff]
    %v239 = vld [vmem:[#allocation7 + $0x158] sm:$0xff]
    %v240 = vld [vmem:[#allocation7 + $0x160] sm:$0xff]
    %v241 = vld [vmem:[#allocation7 + $0x168] sm:$0xff]
    %v242 = vld [vmem:[#allocation7 + $0x170] sm:$0xff]
    %v243 = vld [vmem:[#allocation7 + $0x178] sm:$0xff]
    %v244 = vld [vmem:[#allocation8] sm:$0x3f]
    %v246 = vperm.slane %v244, 0
    %v247 = vperm.slane %v244, 1
    %v248 = vperm.slane %v244, 2
    %v249 = vperm.slane %v244, 3
    %v250 = vperm.slane %v244, 4
    %v251 = vperm.slane %v244, 5
    %v306 = vunpack.c.l.b16 %v196
    %v307 = vunpack.c.h.b16 %v196
    %v308 = vunpack.c.l.b16 %v197
    %v309 = vunpack.c.h.b16 %v197
    %v310 = vunpack.c.l.b16 %v198
    %v311 = vunpack.c.h.b16 %v198
    %v312 = vunpack.c.l.b16 %v199
    %v313 = vunpack.c.h.b16 %v199
    %v314 = vunpack.c.l.b16 %v200
    %v315 = vunpack.c.h.b16 %v200
    %v316 = vunpack.c.l.b16 %v201
    %v317 = vunpack.c.h.b16 %v201
    %v318 = vunpack.c.l.b16 %v202
    %v319 = vunpack.c.h.b16 %v202
    %v320 = vunpack.c.l.b16 %v203
    %v321 = vunpack.c.h.b16 %v203
    %v322 = vunpack.c.l.b16 %v204
    %v323 = vunpack.c.h.b16 %v204
    %v324 = vunpack.c.l.b16 %v205
    %v325 = vunpack.c.h.b16 %v205
    %v326 = vunpack.c.l.b16 %v206
    %v327 = vunpack.c.h.b16 %v206
    %v328 = vunpack.c.l.b16 %v207
    %v329 = vunpack.c.h.b16 %v207
    %v330 = vunpack.c.l.b16 %v208
    %v331 = vunpack.c.h.b16 %v208
    %v332 = vunpack.c.l.b16 %v209
    %v333 = vunpack.c.h.b16 %v209
    %v334 = vunpack.c.l.b16 %v210
    %v335 = vunpack.c.h.b16 %v210
    %v336 = vunpack.c.l.b16 %v211
    %v337 = vunpack.c.h.b16 %v211
    %v338 = vunpack.c.l.b16 %v212
    %v339 = vunpack.c.h.b16 %v212
    %v340 = vunpack.c.l.b16 %v213
    %v341 = vunpack.c.h.b16 %v213
    %v342 = vunpack.c.l.b16 %v214
    %v343 = vunpack.c.h.b16 %v214
    %v344 = vunpack.c.l.b16 %v215
    %v345 = vunpack.c.h.b16 %v215
    %v346 = vunpack.c.l.b16 %v216
    %v347 = vunpack.c.h.b16 %v216
    %v348 = vunpack.c.l.b16 %v217
    %v349 = vunpack.c.h.b16 %v217
    %v350 = vunpack.c.l.b16 %v218
    %v351 = vunpack.c.h.b16 %v218
    %v352 = vunpack.c.l.b16 %v219
    %v353 = vunpack.c.h.b16 %v219
    %v354 = vunpack.c.l.b16 %v220
    %v355 = vunpack.c.h.b16 %v220
    %v356 = vunpack.c.l.b16 %v221
    %v357 = vunpack.c.h.b16 %v221
    %v358 = vunpack.c.l.b16 %v222
    %v359 = vunpack.c.h.b16 %v222
    %v360 = vunpack.c.l.b16 %v223
    %v361 = vunpack.c.h.b16 %v223
    %v362 = vunpack.c.l.b16 %v224
    %v363 = vunpack.c.h.b16 %v224
    %v364 = vunpack.c.l.b16 %v225
    %v365 = vunpack.c.h.b16 %v225
    %v366 = vunpack.c.l.b16 %v226
    %v367 = vunpack.c.h.b16 %v226
    %v368 = vunpack.c.l.b16 %v227
    %v369 = vunpack.c.h.b16 %v227
    %v370 = vunpack.c.l.b16 %v228
    %v371 = vunpack.c.h.b16 %v228
    %v372 = vunpack.c.l.b16 %v229
    %v373 = vunpack.c.h.b16 %v229
    %v374 = vunpack.c.l.b16 %v230
    %v375 = vunpack.c.h.b16 %v230
    %v376 = vunpack.c.l.b16 %v231
    %v377 = vunpack.c.h.b16 %v231
    %v378 = vunpack.c.l.b16 %v232
    %v379 = vunpack.c.h.b16 %v232
    %v380 = vunpack.c.l.b16 %v233
    %v381 = vunpack.c.h.b16 %v233
    %v382 = vunpack.c.l.b16 %v234
    %v383 = vunpack.c.h.b16 %v234
    %v384 = vunpack.c.l.b16 %v235
    %v385 = vunpack.c.h.b16 %v235
    %v386 = vunpack.c.l.b16 %v236
    %v387 = vunpack.c.h.b16 %v236
    %v388 = vunpack.c.l.b16 %v237
    %v389 = vunpack.c.h.b16 %v237
    %v390 = vunpack.c.l.b16 %v238
    %v391 = vunpack.c.h.b16 %v238
    %v392 = vunpack.c.l.b16 %v239
    %v393 = vunpack.c.h.b16 %v239
    %v394 = vunpack.c.l.b16 %v240
    %v395 = vunpack.c.h.b16 %v240
    %v396 = vunpack.c.l.b16 %v241
    %v397 = vunpack.c.h.b16 %v241
    %v398 = vunpack.c.l.b16 %v242
    %v399 = vunpack.c.h.b16 %v242
    %v400 = vunpack.c.l.b16 %v243
    %v401 = vunpack.c.h.b16 %v243
    %v402 = vpack.c.b16 %v312, %v306
    %v403 = vpack.c.b16 %v313, %v307
    %v404 = vpack.c.b16 %v314, %v308
    %v405 = vpack.c.b16 %v315, %v309
    %v406 = vpack.c.b16 %v316, %v310
    %v407 = vpack.c.b16 %v317, %v311
    %v408 = vpack.c.b16 %v324, %v318
    %v409 = vpack.c.b16 %v325, %v319
    %v410 = vpack.c.b16 %v326, %v320
    %v411 = vpack.c.b16 %v327, %v321
    %v412 = vpack.c.b16 %v328, %v322
    %v413 = vpack.c.b16 %v329, %v323
    %v414 = vpack.c.b16 %v336, %v330
    %v415 = vpack.c.b16 %v337, %v331
    %v416 = vpack.c.b16 %v338, %v332
    %v417 = vpack.c.b16 %v339, %v333
    %v418 = vpack.c.b16 %v340, %v334
    %v419 = vpack.c.b16 %v341, %v335
    %v420 = vpack.c.b16 %v348, %v342
    %v421 = vpack.c.b16 %v349, %v343
    %v422 = vpack.c.b16 %v350, %v344
    %v423 = vpack.c.b16 %v351, %v345
    %v424 = vpack.c.b16 %v352, %v346
    %v425 = vpack.c.b16 %v353, %v347
    %v426 = vpack.c.b16 %v360, %v354
    %v427 = vpack.c.b16 %v361, %v355
    %v428 = vpack.c.b16 %v362, %v356
    %v429 = vpack.c.b16 %v363, %v357
    %v430 = vpack.c.b16 %v364, %v358
    %v431 = vpack.c.b16 %v365, %v359
    %v432 = vpack.c.b16 %v372, %v366
    %v433 = vpack.c.b16 %v373, %v367
    %v434 = vpack.c.b16 %v374, %v368
    %v435 = vpack.c.b16 %v375, %v369
    %v436 = vpack.c.b16 %v376, %v370
    %v437 = vpack.c.b16 %v377, %v371
    %v438 = vpack.c.b16 %v384, %v378
    %v439 = vpack.c.b16 %v385, %v379
    %v440 = vpack.c.b16 %v386, %v380
    %v441 = vpack.c.b16 %v387, %v381
    %v442 = vpack.c.b16 %v388, %v382
    %v443 = vpack.c.b16 %v389, %v383
    %v444 = vpack.c.b16 %v396, %v390
    %v445 = vpack.c.b16 %v397, %v391
    %v446 = vpack.c.b16 %v398, %v392
    %v447 = vpack.c.b16 %v399, %v393
    %v448 = vpack.c.b16 %v400, %v394
    %v449 = vpack.c.b16 %v401, %v395
    %498 = vmatpush.bf16.msra.mxu0 %v444
    %499 = vmatpush.bf16.msra.mxu0 %v438
    %500 = vmatpush.bf16.msra.mxu0 %v432
    %501 = vmatpush.bf16.msra.mxu0 %v426
    %502 = vmatpush.bf16.msra.mxu0 %v420
    %503 = vmatpush.bf16.msra.mxu0 %v414
    %504 = vmatpush.bf16.msra.mxu0 %v408
    %505 = vmatpush.bf16.msra.mxu0 %v402
    %506 = vmatmul.bf16.gmra.mxu0 %v195
    %v507 = vpop.f32.mrf.mxu0
    %v508 = vadd.f32 %v246, %v507
    %v509 = vpop.f32.mrf.mxu0
    %v510 = vadd.f32 %v246, %v509
    %511 = vdwg.mxu0
    %512 = vmatpush.bf16.msra.mxu0 %v445
    %513 = vmatpush.bf16.msra.mxu0 %v439
    %514 = vmatpush.bf16.msra.mxu0 %v433
    %515 = vmatpush.bf16.msra.mxu0 %v427
    %516 = vmatpush.bf16.msra.mxu0 %v421
    %517 = vmatpush.bf16.msra.mxu0 %v415
    %518 = vmatpush.bf16.msra.mxu0 %v409
    %519 = vmatpush.bf16.msra.mxu0 %v403
    %520 = vmatmul.bf16.gmra.mxu0 %v195
    %v521 = vpop.f32.mrf.mxu0
    %v522 = vadd.f32 %v247, %v521
    %v523 = vpop.f32.mrf.mxu0
    %v524 = vadd.f32 %v247, %v523
    %525 = vdwg.mxu0
    %526 = vmatpush.bf16.msra.mxu0 %v446
    %527 = vmatpush.bf16.msra.mxu0 %v440
    %528 = vmatpush.bf16.msra.mxu0 %v434
    %529 = vmatpush.bf16.msra.mxu0 %v428
    %530 = vmatpush.bf16.msra.mxu0 %v422
    %531 = vmatpush.bf16.msra.mxu0 %v416
    %532 = vmatpush.bf16.msra.mxu0 %v410
    %533 = vmatpush.bf16.msra.mxu0 %v404
    %534 = vmatmul.bf16.gmra.mxu0 %v195
    %v535 = vpop.f32.mrf.mxu0
    %v536 = vadd.f32 %v248, %v535
    %v537 = vpop.f32.mrf.mxu0
    %v538 = vadd.f32 %v248, %v537
    %539 = vdwg.mxu0
    %540 = vmatpush.bf16.msra.mxu0 %v447
    %541 = vmatpush.bf16.msra.mxu0 %v441
    %542 = vmatpush.bf16.msra.mxu0 %v435
    %543 = vmatpush.bf16.msra.mxu0 %v429
    %544 = vmatpush.bf16.msra.mxu0 %v423
    %545 = vmatpush.bf16.msra.mxu0 %v417
    %546 = vmatpush.bf16.msra.mxu0 %v411
    %547 = vmatpush.bf16.msra.mxu0 %v405
    %548 = vmatmul.bf16.gmra.mxu0 %v195
    %v549 = vpop.f32.mrf.mxu0
    %v550 = vadd.f32 %v249, %v549
    %v551 = vpop.f32.mrf.mxu0
    %v552 = vadd.f32 %v249, %v551
    %553 = vdwg.mxu0
    %554 = vmatpush.bf16.msra.mxu0 %v448
    %555 = vmatpush.bf16.msra.mxu0 %v442
    %556 = vmatpush.bf16.msra.mxu0 %v436
    %557 = vmatpush.bf16.msra.mxu0 %v430
    %558 = vmatpush.bf16.msra.mxu0 %v424
    %559 = vmatpush.bf16.msra.mxu0 %v418
    %560 = vmatpush.bf16.msra.mxu0 %v412
    %561 = vmatpush.bf16.msra.mxu0 %v406
    %562 = vmatmul.bf16.gmra.mxu0 %v195
    %v563 = vpop.f32.mrf.mxu0
    %v564 = vadd.f32 %v250, %v563
    %v565 = vpop.f32.mrf.mxu0
    %v566 = vadd.f32 %v250, %v565
    %567 = vdwg.mxu0
    %568 = vmatpush.bf16.msra.mxu0 %v449
    %569 = vmatpush.bf16.msra.mxu0 %v443
    %570 = vmatpush.bf16.msra.mxu0 %v437
    %571 = vmatpush.bf16.msra.mxu0 %v431
    %572 = vmatpush.bf16.msra.mxu0 %v425
    %573 = vmatpush.bf16.msra.mxu0 %v419
    %574 = vmatpush.bf16.msra.mxu0 %v413
    %575 = vmatpush.bf16.msra.mxu0 %v407
    %576 = vmatmul.bf16.gmra.mxu0 %v195
    %v577 = vpop.f32.mrf.mxu0
    %v578 = vadd.f32 %v251, %v577
    %v579 = vpop.f32.mrf.mxu0
    %v580 = vadd.f32 %v251, %v579
    %581 = vdwg.mxu0
    %v582 = vmax.f32 %v508, 0.0
    %v583 = vmax.f32 %v522, 0.0
    %v584 = vmax.f32 %v536, 0.0
    %v585 = vmax.f32 %v550, 0.0
    %v586 = vmax.f32 %v564, 0.0
    %v587 = vmax.f32 %v578, 0.0
    %v588 = vmax.f32 %v510, 0.0
    %v589 = vmax.f32 %v524, 0.0
    %v590 = vmax.f32 %v538, 0.0
    %v591 = vmax.f32 %v552, 0.0
    %v592 = vmax.f32 %v566, 0.0
    %v593 = vmax.f32 %v580, 0.0
    %v594 = vpack.c.bf16 %v588, %v582
    %v595 = vpack.c.bf16 %v589, %v583
    %v596 = vpack.c.bf16 %v590, %v584
    %v597 = vpack.c.bf16 %v591, %v585
    %v598 = vpack.c.bf16 %v592, %v586
    %v599 = vpack.c.bf16 %v593, %v587
    %v600 = vld [vmem:[#allocation10] sm:$0xf]
    %v601 = vld [vmem:[#allocation10 + $0x4] sm:$0xf]
    %v602 = vld [vmem:[#allocation10 + $0x8] sm:$0xf]
    %v603 = vld [vmem:[#allocation10 + $0xc] sm:$0xf]
    %v604 = vld [vmem:[#allocation10 + $0x10] sm:$0xf]
    %v605 = vld [vmem:[#allocation10 + $0x14] sm:$0xf]
    %v606 = vld [vmem:[#allocation10 + $0x18] sm:$0xf]
    %v607 = vld [vmem:[#allocation10 + $0x1c] sm:$0xf]
    %v608 = vld [vmem:[#allocation10 + $0x20] sm:$0xf]
    %v609 = vld [vmem:[#allocation10 + $0x24] sm:$0xf]
    %v610 = vld [vmem:[#allocation10 + $0x28] sm:$0xf]
    %v611 = vld [vmem:[#allocation10 + $0x2c] sm:$0xf]
    %v612 = vld [vmem:[#allocation10 + $0x30] sm:$0xf]
    %v613 = vld [vmem:[#allocation10 + $0x34] sm:$0xf]
    %v614 = vld [vmem:[#allocation10 + $0x38] sm:$0xf]
    %v615 = vld [vmem:[#allocation10 + $0x3c] sm:$0xf]
    %v616 = vld [vmem:[#allocation10 + $0x40] sm:$0xf]
    %v617 = vld [vmem:[#allocation10 + $0x44] sm:$0xf]
    %v618 = vld [vmem:[#allocation10 + $0x48] sm:$0xf]
    %v619 = vld [vmem:[#allocation10 + $0x4c] sm:$0xf]
    %v620 = vld [vmem:[#allocation10 + $0x50] sm:$0xf]
    %v621 = vld [vmem:[#allocation10 + $0x54] sm:$0xf]
    %v622 = vld [vmem:[#allocation10 + $0x58] sm:$0xf]
    %v623 = vld [vmem:[#allocation10 + $0x5c] sm:$0xf]
    %v624 = vld [vmem:[#allocation10 + $0x60] sm:$0xf]
    %v625 = vld [vmem:[#allocation10 + $0x64] sm:$0xf]
    %v626 = vld [vmem:[#allocation10 + $0x68] sm:$0xf]
    %v627 = vld [vmem:[#allocation10 + $0x6c] sm:$0xf]
    %v628 = vld [vmem:[#allocation10 + $0x70] sm:$0xf]
    %v629 = vld [vmem:[#allocation10 + $0x74] sm:$0xf]
    %v630 = vld [vmem:[#allocation10 + $0x78] sm:$0xf]
    %v631 = vld [vmem:[#allocation10 + $0x7c] sm:$0xf]
    %v632 = vld [vmem:[#allocation10 + $0x80] sm:$0xf]
    %v633 = vld [vmem:[#allocation10 + $0x84] sm:$0xf]
    %v634 = vld [vmem:[#allocation10 + $0x88] sm:$0xf]
    %v635 = vld [vmem:[#allocation10 + $0x8c] sm:$0xf]
    %v636 = vld [vmem:[#allocation10 + $0x90] sm:$0xf]
    %v637 = vld [vmem:[#allocation10 + $0x94] sm:$0xf]
    %v638 = vld [vmem:[#allocation10 + $0x98] sm:$0xf]
    %v639 = vld [vmem:[#allocation10 + $0x9c] sm:$0xf]
    %v640 = vld [vmem:[#allocation10 + $0xa0] sm:$0xf]
    %v641 = vld [vmem:[#allocation10 + $0xa4] sm:$0xf]
    %v642 = vld [vmem:[#allocation10 + $0xa8] sm:$0xf]
    %v643 = vld [vmem:[#allocation10 + $0xac] sm:$0xf]
    %v644 = vld [vmem:[#allocation10 + $0xb0] sm:$0xf]
    %v645 = vld [vmem:[#allocation10 + $0xb4] sm:$0xf]
    %v646 = vld [vmem:[#allocation10 + $0xb8] sm:$0xf]
    %v647 = vld [vmem:[#allocation10 + $0xbc] sm:$0xf]
    %v648 = vld [vmem:[#allocation10 + $0xc0] sm:$0xf]
    %v649 = vld [vmem:[#allocation10 + $0xc4] sm:$0xf]
    %v650 = vld [vmem:[#allocation10 + $0xc8] sm:$0xf]
    %v651 = vld [vmem:[#allocation10 + $0xcc] sm:$0xf]
    %v652 = vld [vmem:[#allocation10 + $0xd0] sm:$0xf]
    %v653 = vld [vmem:[#allocation10 + $0xd4] sm:$0xf]
    %v654 = vld [vmem:[#allocation10 + $0xd8] sm:$0xf]
    %v655 = vld [vmem:[#allocation10 + $0xdc] sm:$0xf]
    %v656 = vld [vmem:[#allocation10 + $0xe0] sm:$0xf]
    %v657 = vld [vmem:[#allocation10 + $0xe4] sm:$0xf]
    %v658 = vld [vmem:[#allocation10 + $0xe8] sm:$0xf]
    %v659 = vld [vmem:[#allocation10 + $0xec] sm:$0xf]
    %v660 = vld [vmem:[#allocation10 + $0xf0] sm:$0xf]
    %v661 = vld [vmem:[#allocation10 + $0xf4] sm:$0xf]
    %v662 = vld [vmem:[#allocation10 + $0xf8] sm:$0xf]
    %v663 = vld [vmem:[#allocation10 + $0xfc] sm:$0xf]
    %v664 = vld [vmem:[#allocation10 + $0x100] sm:$0xf]
    %v665 = vld [vmem:[#allocation10 + $0x104] sm:$0xf]
    %v666 = vld [vmem:[#allocation10 + $0x108] sm:$0xf]
    %v667 = vld [vmem:[#allocation10 + $0x10c] sm:$0xf]
    %v668 = vld [vmem:[#allocation10 + $0x110] sm:$0xf]
    %v669 = vld [vmem:[#allocation10 + $0x114] sm:$0xf]
    %v670 = vld [vmem:[#allocation10 + $0x118] sm:$0xf]
    %v671 = vld [vmem:[#allocation10 + $0x11c] sm:$0xf]
    %v672 = vld [vmem:[#allocation10 + $0x120] sm:$0xf]
    %v673 = vld [vmem:[#allocation10 + $0x124] sm:$0xf]
    %v674 = vld [vmem:[#allocation10 + $0x128] sm:$0xf]
    %v675 = vld [vmem:[#allocation10 + $0x12c] sm:$0xf]
    %v676 = vld [vmem:[#allocation10 + $0x130] sm:$0xf]
    %v677 = vld [vmem:[#allocation10 + $0x134] sm:$0xf]
    %v678 = vld [vmem:[#allocation10 + $0x138] sm:$0xf]
    %v679 = vld [vmem:[#allocation10 + $0x13c] sm:$0xf]
    %v680 = vld [vmem:[#allocation10 + $0x140] sm:$0xf]
    %v681 = vld [vmem:[#allocation10 + $0x144] sm:$0xf]
    %v682 = vld [vmem:[#allocation10 + $0x148] sm:$0xf]
    %v683 = vld [vmem:[#allocation10 + $0x14c] sm:$0xf]
    %v684 = vld [vmem:[#allocation10 + $0x150] sm:$0xf]
    %v685 = vld [vmem:[#allocation10 + $0x154] sm:$0xf]
    %v686 = vld [vmem:[#allocation10 + $0x158] sm:$0xf]
    %v687 = vld [vmem:[#allocation10 + $0x15c] sm:$0xf]
    %v688 = vld [vmem:[#allocation10 + $0x160] sm:$0xf]
    %v689 = vld [vmem:[#allocation10 + $0x164] sm:$0xf]
    %v690 = vld [vmem:[#allocation10 + $0x168] sm:$0xf]
    %v691 = vld [vmem:[#allocation10 + $0x16c] sm:$0xf]
    %v692 = vld [vmem:[#allocation10 + $0x170] sm:$0xf]
    %v693 = vld [vmem:[#allocation10 + $0x174] sm:$0xf]
    %v694 = vld [vmem:[#allocation10 + $0x178] sm:$0xf]
    %v695 = vld [vmem:[#allocation10 + $0x17c] sm:$0xf]
    %v696 = vld [vmem:[%s6] sm:$0x1]
    %v698 = vperm.slane %v696, 0
    %v796 = vunpack.c.l.b16 %v600
    %v797 = vunpack.c.l.b16 %v601
    %v798 = vunpack.c.l.b16 %v602
    %v799 = vunpack.c.l.b16 %v603
    %v800 = vunpack.c.l.b16 %v604
    %v801 = vunpack.c.l.b16 %v605
    %v802 = vunpack.c.l.b16 %v606
    %v803 = vunpack.c.l.b16 %v607
    %v804 = vunpack.c.l.b16 %v608
    %v805 = vunpack.c.l.b16 %v609
    %v806 = vunpack.c.l.b16 %v610
    %v807 = vunpack.c.l.b16 %v611
    %v808 = vunpack.c.l.b16 %v612
    %v809 = vunpack.c.l.b16 %v613
    %v810 = vunpack.c.l.b16 %v614
    %v811 = vunpack.c.l.b16 %v615
    %v812 = vunpack.c.l.b16 %v616
    %v813 = vunpack.c.l.b16 %v617
    %v814 = vunpack.c.l.b16 %v618
    %v815 = vunpack.c.l.b16 %v619
    %v816 = vunpack.c.l.b16 %v620
    %v817 = vunpack.c.l.b16 %v621
    %v818 = vunpack.c.l.b16 %v622
    %v819 = vunpack.c.l.b16 %v623
    %v820 = vunpack.c.l.b16 %v624
    %v821 = vunpack.c.l.b16 %v625
    %v822 = vunpack.c.l.b16 %v626
    %v823 = vunpack.c.l.b16 %v627
    %v824 = vunpack.c.l.b16 %v628
    %v825 = vunpack.c.l.b16 %v629
    %v826 = vunpack.c.l.b16 %v630
    %v827 = vunpack.c.l.b16 %v631
    %v828 = vunpack.c.l.b16 %v632
    %v829 = vunpack.c.l.b16 %v633
    %v830 = vunpack.c.l.b16 %v634
    %v831 = vunpack.c.l.b16 %v635
    %v832 = vunpack.c.l.b16 %v636
    %v833 = vunpack.c.l.b16 %v637
    %v834 = vunpack.c.l.b16 %v638
    %v835 = vunpack.c.l.b16 %v639
    %v836 = vunpack.c.l.b16 %v640
    %v837 = vunpack.c.l.b16 %v641
    %v838 = vunpack.c.l.b16 %v642
    %v839 = vunpack.c.l.b16 %v643
    %v840 = vunpack.c.l.b16 %v644
    %v841 = vunpack.c.l.b16 %v645
    %v842 = vunpack.c.l.b16 %v646
    %v843 = vunpack.c.l.b16 %v647
    %v844 = vunpack.c.l.b16 %v648
    %v845 = vunpack.c.l.b16 %v649
    %v846 = vunpack.c.l.b16 %v650
    %v847 = vunpack.c.l.b16 %v651
    %v848 = vunpack.c.l.b16 %v652
    %v849 = vunpack.c.l.b16 %v653
    %v850 = vunpack.c.l.b16 %v654
    %v851 = vunpack.c.l.b16 %v655
    %v852 = vunpack.c.l.b16 %v656
    %v853 = vunpack.c.l.b16 %v657
    %v854 = vunpack.c.l.b16 %v658
    %v855 = vunpack.c.l.b16 %v659
    %v856 = vunpack.c.l.b16 %v660
    %v857 = vunpack.c.l.b16 %v661
    %v858 = vunpack.c.l.b16 %v662
    %v859 = vunpack.c.l.b16 %v663
    %v860 = vunpack.c.l.b16 %v664
    %v861 = vunpack.c.l.b16 %v665
    %v862 = vunpack.c.l.b16 %v666
    %v863 = vunpack.c.l.b16 %v667
    %v864 = vunpack.c.l.b16 %v668
    %v865 = vunpack.c.l.b16 %v669
    %v866 = vunpack.c.l.b16 %v670
    %v867 = vunpack.c.l.b16 %v671
    %v868 = vunpack.c.l.b16 %v672
    %v869 = vunpack.c.l.b16 %v673
    %v870 = vunpack.c.l.b16 %v674
    %v871 = vunpack.c.l.b16 %v675
    %v872 = vunpack.c.l.b16 %v676
    %v873 = vunpack.c.l.b16 %v677
    %v874 = vunpack.c.l.b16 %v678
    %v875 = vunpack.c.l.b16 %v679
    %v876 = vunpack.c.l.b16 %v680
    %v877 = vunpack.c.l.b16 %v681
    %v878 = vunpack.c.l.b16 %v682
    %v879 = vunpack.c.l.b16 %v683
    %v880 = vunpack.c.l.b16 %v684
    %v881 = vunpack.c.l.b16 %v685
    %v882 = vunpack.c.l.b16 %v686
    %v883 = vunpack.c.l.b16 %v687
    %v884 = vunpack.c.l.b16 %v688
    %v885 = vunpack.c.l.b16 %v689
    %v886 = vunpack.c.l.b16 %v690
    %v887 = vunpack.c.l.b16 %v691
    %v888 = vunpack.c.l.b16 %v692
    %v889 = vunpack.c.l.b16 %v693
    %v890 = vunpack.c.l.b16 %v694
    %v891 = vunpack.c.l.b16 %v695
    %v892 = vpack.c.b16 %v797, %v796
    %v893 = vpack.c.b16 %v799, %v798
    %v894 = vpack.c.b16 %v801, %v800
    %v895 = vpack.c.b16 %v803, %v802
    %v896 = vpack.c.b16 %v805, %v804
    %v897 = vpack.c.b16 %v807, %v806
    %v898 = vpack.c.b16 %v809, %v808
    %v899 = vpack.c.b16 %v811, %v810
    %v900 = vpack.c.b16 %v813, %v812
    %v901 = vpack.c.b16 %v815, %v814
    %v902 = vpack.c.b16 %v817, %v816
    %v903 = vpack.c.b16 %v819, %v818
    %v904 = vpack.c.b16 %v821, %v820
    %v905 = vpack.c.b16 %v823, %v822
    %v906 = vpack.c.b16 %v825, %v824
    %v907 = vpack.c.b16 %v827, %v826
    %v908 = vpack.c.b16 %v829, %v828
    %v909 = vpack.c.b16 %v831, %v830
    %v910 = vpack.c.b16 %v833, %v832
    %v911 = vpack.c.b16 %v835, %v834
    %v912 = vpack.c.b16 %v837, %v836
    %v913 = vpack.c.b16 %v839, %v838
    %v914 = vpack.c.b16 %v841, %v840
    %v915 = vpack.c.b16 %v843, %v842
    %v916 = vpack.c.b16 %v845, %v844
    %v917 = vpack.c.b16 %v847, %v846
    %v918 = vpack.c.b16 %v849, %v848
    %v919 = vpack.c.b16 %v851, %v850
    %v920 = vpack.c.b16 %v853, %v852
    %v921 = vpack.c.b16 %v855, %v854
    %v922 = vpack.c.b16 %v857, %v856
    %v923 = vpack.c.b16 %v859, %v858
    %v924 = vpack.c.b16 %v861, %v860
    %v925 = vpack.c.b16 %v863, %v862
    %v926 = vpack.c.b16 %v865, %v864
    %v927 = vpack.c.b16 %v867, %v866
    %v928 = vpack.c.b16 %v869, %v868
    %v929 = vpack.c.b16 %v871, %v870
    %v930 = vpack.c.b16 %v873, %v872
    %v931 = vpack.c.b16 %v875, %v874
    %v932 = vpack.c.b16 %v877, %v876
    %v933 = vpack.c.b16 %v879, %v878
    %v934 = vpack.c.b16 %v881, %v880
    %v935 = vpack.c.b16 %v883, %v882
    %v936 = vpack.c.b16 %v885, %v884
    %v937 = vpack.c.b16 %v887, %v886
    %v938 = vpack.c.b16 %v889, %v888
    %v939 = vpack.c.b16 %v891, %v890
    %988 = vmatpush.bf16.msra.mxu0 %v899
    %989 = vmatpush.bf16.msra.mxu0 %v898
    %990 = vmatpush.bf16.msra.mxu0 %v897
    %991 = vmatpush.bf16.msra.mxu0 %v896
    %992 = vmatpush.bf16.msra.mxu0 %v895
    %993 = vmatpush.bf16.msra.mxu0 %v894
    %994 = vmatpush.bf16.msra.mxu0 %v893
    %995 = vmatpush.bf16.msra.mxu0 %v892
    %996 = vmatmul.bf16.gmra.mxu0 %v594
    %v997 = vpop.f32.mrf.mxu0
    %v998 = vadd.f32 %v698, %v997
    %v999 = vpop.f32.mrf.mxu0
    %v1000 = vadd.f32 %v698, %v999
    %1001 = vdwg.mxu0
    %1002 = vmatpush.bf16.msra.mxu0 %v907
    %1003 = vmatpush.bf16.msra.mxu0 %v906
    %1004 = vmatpush.bf16.msra.mxu0 %v905
    %1005 = vmatpush.bf16.msra.mxu0 %v904
    %1006 = vmatpush.bf16.msra.mxu0 %v903
    %1007 = vmatpush.bf16.msra.mxu0 %v902
    %1008 = vmatpush.bf16.msra.mxu0 %v901
    %1009 = vmatpush.bf16.msra.mxu0 %v900
    %1010 = vmatmul.bf16.gmra.mxu0 %v595
    %v1011 = vpop.f32.mrf.mxu0
    %v1012 = vadd.f32 %v998, %v1011
    %v1013 = vpop.f32.mrf.mxu0
    %v1014 = vadd.f32 %v1000, %v1013
    %1015 = vdwg.mxu0
    %1016 = vmatpush.bf16.msra.mxu0 %v915
    %1017 = vmatpush.bf16.msra.mxu0 %v914
    %1018 = vmatpush.bf16.msra.mxu0 %v913
    %1019 = vmatpush.bf16.msra.mxu0 %v912
    %1020 = vmatpush.bf16.msra.mxu0 %v911
    %1021 = vmatpush.bf16.msra.mxu0 %v910
    %1022 = vmatpush.bf16.msra.mxu0 %v909
    %1023 = vmatpush.bf16.msra.mxu0 %v908
    %1024 = vmatmul.bf16.gmra.mxu0 %v596
    %v1025 = vpop.f32.mrf.mxu0
    %v1026 = vadd.f32 %v1012, %v1025
    %v1027 = vpop.f32.mrf.mxu0
    %v1028 = vadd.f32 %v1014, %v1027
    %1029 = vdwg.mxu0
    %1030 = vmatpush.bf16.msra.mxu0 %v923
    %1031 = vmatpush.bf16.msra.mxu0 %v922
    %1032 = vmatpush.bf16.msra.mxu0 %v921
    %1033 = vmatpush.bf16.msra.mxu0 %v920
    %1034 = vmatpush.bf16.msra.mxu0 %v919
    %1035 = vmatpush.bf16.msra.mxu0 %v918
    %1036 = vmatpush.bf16.msra.mxu0 %v917
    %1037 = vmatpush.bf16.msra.mxu0 %v916
    %1038 = vmatmul.bf16.gmra.mxu0 %v597
    %v1039 = vpop.f32.mrf.mxu0
    %v1040 = vadd.f32 %v1026, %v1039
    %v1041 = vpop.f32.mrf.mxu0
    %v1042 = vadd.f32 %v1028, %v1041
    %1043 = vdwg.mxu0
    %1044 = vmatpush.bf16.msra.mxu0 %v931
    %1045 = vmatpush.bf16.msra.mxu0 %v930
    %1046 = vmatpush.bf16.msra.mxu0 %v929
    %1047 = vmatpush.bf16.msra.mxu0 %v928
    %1048 = vmatpush.bf16.msra.mxu0 %v927
    %1049 = vmatpush.bf16.msra.mxu0 %v926
    %1050 = vmatpush.bf16.msra.mxu0 %v925
    %1051 = vmatpush.bf16.msra.mxu0 %v924
    %1052 = vmatmul.bf16.gmra.mxu0 %v598
    %v1053 = vpop.f32.mrf.mxu0
    %v1054 = vadd.f32 %v1040, %v1053
    %v1055 = vpop.f32.mrf.mxu0
    %v1056 = vadd.f32 %v1042, %v1055
    %1057 = vdwg.mxu0
    %1058 = vmatpush.bf16.msra.mxu0 %v939
    %1059 = vmatpush.bf16.msra.mxu0 %v938
    %1060 = vmatpush.bf16.msra.mxu0 %v937
    %1061 = vmatpush.bf16.msra.mxu0 %v936
    %1062 = vmatpush.bf16.msra.mxu0 %v935
    %1063 = vmatpush.bf16.msra.mxu0 %v934
    %1064 = vmatpush.bf16.msra.mxu0 %v933
    %1065 = vmatpush.bf16.msra.mxu0 %v932
    %1066 = vmatmul.bf16.gmra.mxu0 %v599
    %v1067 = vpop.f32.mrf.mxu0
    %v1068 = vadd.f32 %v1054, %v1067
    %v1069 = vpop.f32.mrf.mxu0
    %v1070 = vadd.f32 %v1056, %v1069
    %1071 = vdwg.mxu0
    %1072 = vst [vmem:[#allocation11] sm:$0xff] %v1068
    %1073 = vst [vmem:[#allocation11 + $0x8] sm:$0xff] %v1070
    // Predicated region
    $region50: #{tpu_custom_call.1} parent=1 // pred_check
      _
    $region51: #{tpu_custom_call.1} parent=1 // pred_check_branch
      %1075 = sbr.rel (0) target = $region53
    $region52: #{tpu_custom_call.1} parent=1 // pred_region
      %1077 = vsyncadd [#allocation4], 0
      %s1078 = sshll.u32 [#allocation11], 4
      %s1079 = int_to_ptr.vmem [resolvable:$true] %s1078
      %s1080 = sshll.u32 %s7, 4
      %s1081 = int_to_ptr.hbm [resolvable:$true] %s1080
      %1086 = dma.vmem_to_hbm [thread:$0]  %s1079, 256, %s1081, [#allocation4], 128, 128, 8
    $region53: #{tpu_custom_call.1} parent=1 // pred_fallthru
      _
    // Predicated region
    $region54: #{tpu_custom_call.1} parent=1 // pred_check
      _
    $region55: #{tpu_custom_call.1} parent=1 // pred_check_branch
      %1088 = sbr.rel (0) target = $region57
    $region56: #{tpu_custom_call.1} parent=1 // pred_region
      %1090 = dma.done [#allocation4], 256
    $region57: #{tpu_custom_call.1} parent=1 // pred_fallthru
      _
    %1091 = vsyncpa [#allocation3], 1
    %1092 = vsyncpa [#allocation6], 1
    %1093 = vsyncpa [#allocation9], 1
    %1094 = vsyncpa [#allocation4], 1

</llo_original>
